<compile_context>
chip_gen: v7x
topology: tpu7x:2x2x1
jax: 0.10.0
libtpu: 0.0.40
codegen_flags: <defaults>
</compile_context>

<pallas_src>
import jax
import jax.numpy as jnp
from jax.experimental import pallas as pl
from jax.experimental.pallas import tpu as pltpu


def _log_sigmoid(x):
    # Numerically stable log(sigmoid(x)) = min(x, 0) - log1p(exp(-|x|)), in f32.
    return jnp.minimum(x, 0.0) - jnp.log1p(jnp.exp(-jnp.abs(x)))


def _make_skipgram_kernel(*, k, v, d, tile_n):
    """Kernel for one tile of TN samples; tables are VMEM-resident."""

    def kernel(in_idx_ref, out_idx_ref, neg_idx_ref, in_wt_ref, out_wt_ref, o_ref):
        # Resident (D, V) tables; upcast to f32 (tables may be stored in bf16).
        in_wt = in_wt_ref[...].astype(jnp.float32)     # (D, V)
        out_wt = out_wt_ref[...].astype(jnp.float32)   # (D, V)

        # One-hot "gather" of rows via MXU matmul, keeping samples on the lane axis:
        #   rows_T[d, i] = table[idx_i, d]            -> shape (D, TN), lane-dense.
        vocab_iota = jax.lax.broadcasted_iota(jnp.int32, (v, tile_n), 0)   # (V, TN)

        def gather_t(table_t, idx_row):                # idx_row: (1, TN) int32
            onehot = (vocab_iota == idx_row).astype(jnp.float32)           # (V, TN)
            return jnp.dot(table_t, onehot, preferred_element_type=jnp.float32)  # (D, TN)

        in_rows = gather_t(in_wt, in_idx_ref[0])       # (D, TN)
        pos_rows = gather_t(out_wt, out_idx_ref[0])    # (D, TN)

        # Positive term: logsig(<in, out>), reduction along sublanes (D), lanes stay dense.
        pos_score = jnp.sum(in_rows * pos_rows, axis=0, keepdims=True)     # (1, TN)
        loss = _log_sigmoid(pos_score)

        # Negative terms: logsig(-<in, neg_j>) for each of the k negatives (k small, unrolled).
        neg_idx = neg_idx_ref[0]                       # (k, TN)
        for j in range(k):
            neg_rows = gather_t(out_wt, neg_idx[j:j + 1, :])               # (D, TN)
            neg_score = jnp.sum(in_rows * neg_rows, axis=0, keepdims=True)
            loss = loss + _log_sigmoid(-neg_score)

        # Lane-dense per-sample loss slab for this tile.
        o_ref[...] = loss.reshape(o_ref.shape)         # (1, 1, TN)

    return kernel


def skipgram_forward(input_w, output_w, input_idx, output_idx, neg_idx, *, tile_n=128):
    """Skipgram loss: batched tiles, VMEM-resident tables, in-kernel one-hot gather."""
    n = input_idx.shape[0]
    k = neg_idx.shape[1]
    v, d = input_w.shape
    itemsize = jnp.dtype(input_w.dtype).itemsize

    num_tiles = pl.cdiv(n, tile_n)
    n_pad = num_tiles * tile_n
    pad = n_pad - n

    # Pad to a whole number of tiles (index 0 is a valid row; padded samples are dropped
    # before the mean), lay indices out with samples on the lane axis.
    in_idx = jnp.pad(input_idx.astype(jnp.int32), (0, pad)).reshape(num_tiles, 1, tile_n)
    out_idx = jnp.pad(output_idx.astype(jnp.int32), (0, pad)).reshape(num_tiles, 1, tile_n)
    neg = jnp.pad(neg_idx.astype(jnp.int32), ((0, pad), (0, 0)))           # (n_pad, k)
    neg = neg.reshape(num_tiles, tile_n, k).transpose(0, 2, 1)             # (tiles, k, TN)

    # Transposed (D, V) tables: one-time XLA transpose, loaded into VMEM exactly once.
    in_wt = input_w.T
    out_wt = output_w.T

    # VMEM budget: resident tables + small double-buffered per-tile index/output blocks.
    table_bytes = 2 * v * d * itemsize
    tile_bytes = 4 * (k + 3) * tile_n * 4
    vmem_limit = int(min(max(2 * table_bytes + tile_bytes + (8 << 20), 32 << 20), 48 << 20))

    cost = pl.CostEstimate(
        flops=int(num_tiles * tile_n * (2 * d * v * (2 + k) + 2 * d * (1 + k))),
        transcendentals=int(2 * num_tiles * tile_n * (1 + k)),
        bytes_accessed=int(table_bytes + (3 + k) * n_pad * 4),
    )

    partial = pl.pallas_call(
        _make_skipgram_kernel(k=k, v=v, d=d, tile_n=tile_n),
        out_shape=jax.ShapeDtypeStruct((num_tiles, 1, tile_n), jnp.float32),
        grid_spec=pltpu.PrefetchScalarGridSpec(
            num_scalar_prefetch=0,
            grid=(num_tiles,),                                   # TN samples per grid step
            in_specs=[
                pl.BlockSpec((1, 1, tile_n), lambda t: (t, 0, 0)),   # input_idx tile
                pl.BlockSpec((1, 1, tile_n), lambda t: (t, 0, 0)),   # output_idx tile
                pl.BlockSpec((1, k, tile_n), lambda t: (t, 0, 0)),   # neg_idx tile
                pl.BlockSpec((d, v), lambda t: (0, 0)),              # input table (resident)
                pl.BlockSpec((d, v), lambda t: (0, 0)),              # output table (resident)
            ],
            out_specs=pl.BlockSpec((1, 1, tile_n), lambda t: (t, 0, 0)),
        ),
        compiler_params=pltpu.CompilerParams(
            dimension_semantics=("parallel",),     # tile axis shards across v7x's 2 TCs
            vmem_limit_bytes=vmem_limit,
        ),
        cost_estimate=cost,
    )(in_idx, out_idx, neg, in_wt, out_wt)

    # Drop padded samples, mean over the true batch size (done in JAX on the lane-dense slab).
    per_sample = partial.reshape(-1)[:n]
    return jnp.mean(per_sample)


def skipgram_reference(input_w, output_w, input_idx, output_idx, neg_idx):
    """Pure-JAX reference mirroring the PyTorch forward (k > 1 branch)."""
    in_vecs = input_w[input_idx]
    out_vecs = output_w[output_idx]
    neg_vecs = output_w[neg_idx]
    prob = jax.nn.log_sigmoid(jnp.sum(in_vecs * out_vecs, axis=-1))
    noise = jax.nn.log_sigmoid(-jnp.einsum("nd,nkd->nk", in_vecs, neg_vecs))
    return jnp.mean(prob + jnp.sum(noise, axis=1))


if __name__ == "__main__":
    # Small deterministic setup consistent with the module.
    n_words, n_dims = 50, 32    # vocabulary size, embedding dim
    N, k = 8, 4                 # batch size, negative samples per pair

    key = jax.random.PRNGKey(0)
    k_in, k_out, k_i, k_o, k_n = jax.random.split(key, 5)

    # Embedding tables initialized uniform(-1, 1) like the PyTorch module.
    input_w = jax.random.uniform(k_in, (n_words, n_dims), jnp.float32, -1.0, 1.0)
    output_w = jax.random.uniform(k_out, (n_words, n_dims), jnp.float32, -1.0, 1.0)

    input_idx = jax.random.randint(k_i, (N,), 0, n_words)
    output_idx = jax.random.randint(k_o, (N,), 0, n_words)
    neg_idx = jax.random.randint(k_n, (N, k), 0, n_words)

    loss = skipgram_forward(input_w, output_w, input_idx, output_idx, neg_idx)
    loss = jax.block_until_ready(loss)

    ref = skipgram_reference(input_w, output_w, input_idx, output_idx, neg_idx)
    assert jnp.allclose(loss, ref, atol=1e-5, rtol=1e-5), (loss, ref)

    print("KERNEL_OK")
</pallas_src>

<mosaic_0001>
module attributes {stable_mosaic.version = 11 : i64} {
  func.func @kernel(%arg0: i32, %arg1: memref<1x1x128xi32, #tpu.memory_space<vmem>>, %arg2: memref<1x1x128xi32, #tpu.memory_space<vmem>>, %arg3: memref<1x4x128xi32, #tpu.memory_space<vmem>>, %arg4: memref<32x50xf32, #tpu.memory_space<vmem>>, %arg5: memref<32x50xf32, #tpu.memory_space<vmem>>, %arg6: memref<1x1x128xf32, #tpu.memory_space<vmem>>) attributes {dimension_semantics = [#tpu.dimension_semantics<parallel>], iteration_bounds = array<i64: 1>, scalar_prefetch = 0 : i64, scratch_operands = 0 : i64, tpu.core_type = #tpu.core_type<tc>, window_params = [{transform_indices = @transform_0, window_bounds = array<i64: 1, 1, 128>}, {transform_indices = @transform_1, window_bounds = array<i64: 1, 1, 128>}, {transform_indices = @transform_2, window_bounds = array<i64: 1, 4, 128>}, {pipeline_mode = #tpu.pipeline_mode<synchronous>, transform_indices = @transform_3, window_bounds = array<i64: 32, 50>}, {pipeline_mode = #tpu.pipeline_mode<synchronous>, transform_indices = @transform_4, window_bounds = array<i64: 32, 50>}, {transform_indices = @transform_5, window_bounds = array<i64: 1, 1, 128>}]} {
    %c0 = arith.constant 0 : index
    %c0_0 = arith.constant 0 : index
    %0 = vector.load %arg4[%c0, %c0_0] : memref<32x50xf32, #tpu.memory_space<vmem>>, vector<32x50xf32>
    %c0_1 = arith.constant 0 : index
    %c0_2 = arith.constant 0 : index
    %1 = vector.load %arg5[%c0_1, %c0_2] : memref<32x50xf32, #tpu.memory_space<vmem>>, vector<32x50xf32>
    %2 = tpu.iota {dimensions = array<i32: 0>} : vector<50x128xi32>
    %c0_3 = arith.constant 0 : index
    %c0_4 = arith.constant 0 : index
    %c0_5 = arith.constant 0 : index
    %3 = vector.load %arg1[%c0_3, %c0_4, %c0_5] : memref<1x1x128xi32, #tpu.memory_space<vmem>>, vector<1x1x128xi32>
    %4 = vector.shape_cast %3 : vector<1x1x128xi32> to vector<1x128xi32>
    %5 = vector.broadcast %4 : vector<1x128xi32> to vector<50x128xi32>
    %6 = arith.cmpi eq, %2, %5 : vector<50x128xi32>
    %7 = arith.extui %6 : vector<50x128xi1> to vector<50x128xi32>
    %8 = arith.sitofp %7 : vector<50x128xi32> to vector<50x128xf32>
    %cst = arith.constant dense<0.000000e+00> : vector<32x128xf32>
    %9 = tpu.matmul %0, %8, %cst {dimension_numbers = #tpu.dot_dimension_numbers<[1], [0], [0], [1], [0, 0, 1, 1], [], []>} : vector<32x50xf32>, vector<50x128xf32>, vector<32x128xf32> -> vector<32x128xf32>
    %c0_6 = arith.constant 0 : index
    %c0_7 = arith.constant 0 : index
    %c0_8 = arith.constant 0 : index
    %10 = vector.load %arg2[%c0_6, %c0_7, %c0_8] : memref<1x1x128xi32, #tpu.memory_space<vmem>>, vector<1x1x128xi32>
    %11 = vector.shape_cast %10 : vector<1x1x128xi32> to vector<1x128xi32>
    %12 = vector.broadcast %11 : vector<1x128xi32> to vector<50x128xi32>
    %13 = arith.cmpi eq, %2, %12 : vector<50x128xi32>
    %14 = arith.extui %13 : vector<50x128xi1> to vector<50x128xi32>
    %15 = arith.sitofp %14 : vector<50x128xi32> to vector<50x128xf32>
    %cst_9 = arith.constant dense<0.000000e+00> : vector<32x128xf32>
    %16 = tpu.matmul %1, %15, %cst_9 {dimension_numbers = #tpu.dot_dimension_numbers<[1], [0], [0], [1], [0, 0, 1, 1], [], []>} : vector<32x50xf32>, vector<50x128xf32>, vector<32x128xf32> -> vector<32x128xf32>
    %17 = arith.mulf %9, %16 : vector<32x128xf32>
    %cst_10 = arith.constant dense<0.000000e+00> : vector<128xf32>
    %18 = vector.multi_reduction <add>, %17, %cst_10 [0] : vector<32x128xf32> to vector<128xf32>
    %19 = vector.shape_cast %18 : vector<128xf32> to vector<1x128xf32>
    %cst_11 = arith.constant 0.000000e+00 : f32
    %20 = vector.broadcast %cst_11 : f32 to vector<1x128xf32>
    %21 = arith.minimumf %19, %20 : vector<1x128xf32>
    %22 = math.absf %19 : vector<1x128xf32>
    %cst_12 = arith.constant 0.000000e+00 : f32
    %23 = vector.broadcast %cst_12 : f32 to vector<1x128xf32>
    %24 = arith.subf %23, %22 : vector<1x128xf32>
    %25 = math.exp %24 : vector<1x128xf32>
    %26 = math.log1p %25 : vector<1x128xf32>
    %27 = arith.subf %21, %26 : vector<1x128xf32>
    %c0_13 = arith.constant 0 : index
    %c0_14 = arith.constant 0 : index
    %c0_15 = arith.constant 0 : index
    %28 = vector.load %arg3[%c0_13, %c0_14, %c0_15] : memref<1x4x128xi32, #tpu.memory_space<vmem>>, vector<1x4x128xi32>
    %29 = vector.shape_cast %28 : vector<1x4x128xi32> to vector<4x128xi32>
    %30 = vector.extract_strided_slice %29 {offsets = [0, 0], sizes = [1, 128], strides = [1, 1]} : vector<4x128xi32> to vector<1x128xi32>
    %31 = vector.broadcast %30 : vector<1x128xi32> to vector<50x128xi32>
    %32 = arith.cmpi eq, %2, %31 : vector<50x128xi32>
    %33 = arith.extui %32 : vector<50x128xi1> to vector<50x128xi32>
    %34 = arith.sitofp %33 : vector<50x128xi32> to vector<50x128xf32>
    %cst_16 = arith.constant dense<0.000000e+00> : vector<32x128xf32>
    %35 = tpu.matmul %1, %34, %cst_16 {dimension_numbers = #tpu.dot_dimension_numbers<[1], [0], [0], [1], [0, 0, 1, 1], [], []>} : vector<32x50xf32>, vector<50x128xf32>, vector<32x128xf32> -> vector<32x128xf32>
    %36 = arith.mulf %9, %35 : vector<32x128xf32>
    %cst_17 = arith.constant dense<0.000000e+00> : vector<128xf32>
    %37 = vector.multi_reduction <add>, %36, %cst_17 [0] : vector<32x128xf32> to vector<128xf32>
    %38 = vector.shape_cast %37 : vector<128xf32> to vector<1x128xf32>
    %cst_18 = arith.constant 0.000000e+00 : f32
    %39 = vector.broadcast %cst_18 : f32 to vector<1x128xf32>
    %40 = arith.subf %39, %38 : vector<1x128xf32>
    %cst_19 = arith.constant 0.000000e+00 : f32
    %41 = vector.broadcast %cst_19 : f32 to vector<1x128xf32>
    %42 = arith.minimumf %40, %41 : vector<1x128xf32>
    %43 = math.absf %40 : vector<1x128xf32>
    %cst_20 = arith.constant 0.000000e+00 : f32
    %44 = vector.broadcast %cst_20 : f32 to vector<1x128xf32>
    %45 = arith.subf %44, %43 : vector<1x128xf32>
    %46 = math.exp %45 : vector<1x128xf32>
    %47 = math.log1p %46 : vector<1x128xf32>
    %48 = arith.subf %42, %47 : vector<1x128xf32>
    %49 = arith.addf %27, %48 : vector<1x128xf32>
    %50 = vector.extract_strided_slice %29 {offsets = [1, 0], sizes = [1, 128], strides = [1, 1]} : vector<4x128xi32> to vector<1x128xi32>
    %51 = vector.broadcast %50 : vector<1x128xi32> to vector<50x128xi32>
    %52 = arith.cmpi eq, %2, %51 : vector<50x128xi32>
    %53 = arith.extui %52 : vector<50x128xi1> to vector<50x128xi32>
    %54 = arith.sitofp %53 : vector<50x128xi32> to vector<50x128xf32>
    %cst_21 = arith.constant dense<0.000000e+00> : vector<32x128xf32>
    %55 = tpu.matmul %1, %54, %cst_21 {dimension_numbers = #tpu.dot_dimension_numbers<[1], [0], [0], [1], [0, 0, 1, 1], [], []>} : vector<32x50xf32>, vector<50x128xf32>, vector<32x128xf32> -> vector<32x128xf32>
    %56 = arith.mulf %9, %55 : vector<32x128xf32>
    %cst_22 = arith.constant dense<0.000000e+00> : vector<128xf32>
    %57 = vector.multi_reduction <add>, %56, %cst_22 [0] : vector<32x128xf32> to vector<128xf32>
    %58 = vector.shape_cast %57 : vector<128xf32> to vector<1x128xf32>
    %cst_23 = arith.constant 0.000000e+00 : f32
    %59 = vector.broadcast %cst_23 : f32 to vector<1x128xf32>
    %60 = arith.subf %59, %58 : vector<1x128xf32>
    %cst_24 = arith.constant 0.000000e+00 : f32
    %61 = vector.broadcast %cst_24 : f32 to vector<1x128xf32>
    %62 = arith.minimumf %60, %61 : vector<1x128xf32>
    %63 = math.absf %60 : vector<1x128xf32>
    %cst_25 = arith.constant 0.000000e+00 : f32
    %64 = vector.broadcast %cst_25 : f32 to vector<1x128xf32>
    %65 = arith.subf %64, %63 : vector<1x128xf32>
    %66 = math.exp %65 : vector<1x128xf32>
    %67 = math.log1p %66 : vector<1x128xf32>
    %68 = arith.subf %62, %67 : vector<1x128xf32>
    %69 = arith.addf %49, %68 : vector<1x128xf32>
    %70 = vector.extract_strided_slice %29 {offsets = [2, 0], sizes = [1, 128], strides = [1, 1]} : vector<4x128xi32> to vector<1x128xi32>
    %71 = vector.broadcast %70 : vector<1x128xi32> to vector<50x128xi32>
    %72 = arith.cmpi eq, %2, %71 : vector<50x128xi32>
    %73 = arith.extui %72 : vector<50x128xi1> to vector<50x128xi32>
    %74 = arith.sitofp %73 : vector<50x128xi32> to vector<50x128xf32>
    %cst_26 = arith.constant dense<0.000000e+00> : vector<32x128xf32>
    %75 = tpu.matmul %1, %74, %cst_26 {dimension_numbers = #tpu.dot_dimension_numbers<[1], [0], [0], [1], [0, 0, 1, 1], [], []>} : vector<32x50xf32>, vector<50x128xf32>, vector<32x128xf32> -> vector<32x128xf32>
    %76 = arith.mulf %9, %75 : vector<32x128xf32>
    %cst_27 = arith.constant dense<0.000000e+00> : vector<128xf32>
    %77 = vector.multi_reduction <add>, %76, %cst_27 [0] : vector<32x128xf32> to vector<128xf32>
    %78 = vector.shape_cast %77 : vector<128xf32> to vector<1x128xf32>
    %cst_28 = arith.constant 0.000000e+00 : f32
    %79 = vector.broadcast %cst_28 : f32 to vector<1x128xf32>
    %80 = arith.subf %79, %78 : vector<1x128xf32>
    %cst_29 = arith.constant 0.000000e+00 : f32
    %81 = vector.broadcast %cst_29 : f32 to vector<1x128xf32>
    %82 = arith.minimumf %80, %81 : vector<1x128xf32>
    %83 = math.absf %80 : vector<1x128xf32>
    %cst_30 = arith.constant 0.000000e+00 : f32
    %84 = vector.broadcast %cst_30 : f32 to vector<1x128xf32>
    %85 = arith.subf %84, %83 : vector<1x128xf32>
    %86 = math.exp %85 : vector<1x128xf32>
    %87 = math.log1p %86 : vector<1x128xf32>
    %88 = arith.subf %82, %87 : vector<1x128xf32>
    %89 = arith.addf %69, %88 : vector<1x128xf32>
    %90 = vector.extract_strided_slice %29 {offsets = [3, 0], sizes = [1, 128], strides = [1, 1]} : vector<4x128xi32> to vector<1x128xi32>
    %91 = vector.broadcast %90 : vector<1x128xi32> to vector<50x128xi32>
    %92 = arith.cmpi eq, %2, %91 : vector<50x128xi32>
    %93 = arith.extui %92 : vector<50x128xi1> to vector<50x128xi32>
    %94 = arith.sitofp %93 : vector<50x128xi32> to vector<50x128xf32>
    %cst_31 = arith.constant dense<0.000000e+00> : vector<32x128xf32>
    %95 = tpu.matmul %1, %94, %cst_31 {dimension_numbers = #tpu.dot_dimension_numbers<[1], [0], [0], [1], [0, 0, 1, 1], [], []>} : vector<32x50xf32>, vector<50x128xf32>, vector<32x128xf32> -> vector<32x128xf32>
    %96 = arith.mulf %9, %95 : vector<32x128xf32>
    %cst_32 = arith.constant dense<0.000000e+00> : vector<128xf32>
    %97 = vector.multi_reduction <add>, %96, %cst_32 [0] : vector<32x128xf32> to vector<128xf32>
    %98 = vector.shape_cast %97 : vector<128xf32> to vector<1x128xf32>
    %cst_33 = arith.constant 0.000000e+00 : f32
    %99 = vector.broadcast %cst_33 : f32 to vector<1x128xf32>
    %100 = arith.subf %99, %98 : vector<1x128xf32>
    %cst_34 = arith.constant 0.000000e+00 : f32
    %101 = vector.broadcast %cst_34 : f32 to vector<1x128xf32>
    %102 = arith.minimumf %100, %101 : vector<1x128xf32>
    %103 = math.absf %100 : vector<1x128xf32>
    %cst_35 = arith.constant 0.000000e+00 : f32
    %104 = vector.broadcast %cst_35 : f32 to vector<1x128xf32>
    %105 = arith.subf %104, %103 : vector<1x128xf32>
    %106 = math.exp %105 : vector<1x128xf32>
    %107 = math.log1p %106 : vector<1x128xf32>
    %108 = arith.subf %102, %107 : vector<1x128xf32>
    %109 = arith.addf %89, %108 : vector<1x128xf32>
    %110 = vector.shape_cast %109 : vector<1x128xf32> to vector<1x1x128xf32>
    %c0_36 = arith.constant 0 : index
    %c0_37 = arith.constant 0 : index
    %c0_38 = arith.constant 0 : index
    %111 = vector.load %arg6[%c0_36, %c0_37, %c0_38] : memref<1x1x128xf32, #tpu.memory_space<vmem>>, vector<1x1x128xf32>
    tpu.vector_store %arg6[%c0_36, %c0_37, %c0_38], %110 {strides = array<i32>} : memref<1x1x128xf32, #tpu.memory_space<vmem>>, vector<1x1x128xf32>,
    return
  }
  func.func @transform_0(%arg0: i32) -> (i32, i32, i32) {
    %c0_i32 = arith.constant 0 : i32
    %c0_i32_0 = arith.constant 0 : i32
    %c0_i32_1 = arith.constant 0 : i32
    return %arg0, %c0_i32, %c0_i32_0 : i32, i32, i32
  }
  func.func @transform_1(%arg0: i32) -> (i32, i32, i32) {
    %c0_i32 = arith.constant 0 : i32
    %c0_i32_0 = arith.constant 0 : i32
    %c0_i32_1 = arith.constant 0 : i32
    return %arg0, %c0_i32, %c0_i32_0 : i32, i32, i32
  }
  func.func @transform_2(%arg0: i32) -> (i32, i32, i32) {
    %c0_i32 = arith.constant 0 : i32
    %c0_i32_0 = arith.constant 0 : i32
    %c0_i32_1 = arith.constant 0 : i32
    return %arg0, %c0_i32, %c0_i32_0 : i32, i32, i32
  }
  func.func @transform_3(%arg0: i32) -> (i32, i32) {
    %c0_i32 = arith.constant 0 : i32
    %c0_i32_0 = arith.constant 0 : i32
    %c0_i32_1 = arith.constant 0 : i32
    return %c0_i32, %c0_i32_0 : i32, i32
  }
  func.func @transform_4(%arg0: i32) -> (i32, i32) {
    %c0_i32 = arith.constant 0 : i32
    %c0_i32_0 = arith.constant 0 : i32
    %c0_i32_1 = arith.constant 0 : i32
    return %c0_i32, %c0_i32_0 : i32, i32
  }
  func.func @transform_5(%arg0: i32) -> (i32, i32, i32) {
    %c0_i32 = arith.constant 0 : i32
    %c0_i32_0 = arith.constant 0 : i32
    %c0_i32_1 = arith.constant 0 : i32
    return %arg0, %c0_i32, %c0_i32_0 : i32, i32, i32
  }
}

</mosaic_0001>

<llo_original>
// kernel: tpu_custom_call.1
$region0: #{tpu_custom_call.1}
  #allocation0 [shape = 'u32[]', space=smem, size = 0x4, offset = 0x4, fixed_abs, tag = 'smem constant byte address 0x4 - core index']
  #allocation1 [shape = 'u32[144,128]{1,0:T(1,128)}', space=vmem, size = 0x12000, scoped, tag = 'internal scratch']
  %s0 = inlined_call_operand.hbm [shape: s32[1,1,128], index: 0, kind: input, shape index: {}]
  %s1 = inlined_call_operand.vmem [shape: s32[1,1,128], index: 1, kind: input, shape index: {}]
  %s2 = inlined_call_operand.vmem [shape: s32[1,4,128], index: 2, kind: input, shape index: {}]
  %s3 = inlined_call_operand.hbm [shape: f32[32,50], index: 3, kind: input, shape index: {}]
  %s4 = inlined_call_operand.hbm [shape: f32[32,50], index: 4, kind: input, shape index: {}]
  %s5 = inlined_call_operand.hbm [shape: f32[1,1,128], index: 5, kind: output, shape index: {}]
  %s6 = sld [smem:[#allocation0]]
  $region42: #{tpu_custom_call.1} parent=0
    _
  %s8 = ssub.s32 1, %s6
  %s9 = scalar_select 0, %s8, %s6
  $region1: #{tpu_custom_call.1} parent=0
    #allocation2 [shape = 'u8[512]{0}', space=vmem, size = 0x400, scoped, tag = 'input window, operand 0, single buffered']
    #allocation3 [shape = 's32[1]{0}', space=sflag, size = 0x4, scoped, tag = 'scoped memory for tpu_custom_call.1']
    #allocation4 [shape = 's32[1]{0}', space=sflag, size = 0x4, scoped, tag = 'scoped memory for tpu_custom_call.1']
    #allocation5 [shape = 'u8[16384]{0}', space=vmem, size = 0x4000, scoped, tag = 'input window, operand 3, single buffered']
    #allocation6 [shape = 's32[1]{0}', space=sflag, size = 0x4, scoped, tag = 'scoped memory for tpu_custom_call.1']
    #allocation7 [shape = 'u8[16384]{0}', space=vmem, size = 0x4000, scoped, tag = 'input window, operand 4, single buffered']
    #allocation8 [shape = 'u8[512]{0}', space=vmem, size = 0x400, scoped, tag = 'output window, operand 0, single buffered']
    %10 = vsyncpa [#allocation3], 0
    %11 = vsyncpa [#allocation6], 0
    %12 = vsyncpa [#allocation4], 0
    // Predicated region
    $region2: #{tpu_custom_call.1} parent=1 // pred_check
      _
    $region3: #{tpu_custom_call.1} parent=1 // pred_check_branch
      %14 = sbr.rel (0) target = $region5
    $region4: #{tpu_custom_call.1} parent=1 // pred_region
      %s16 = ssub.s32 16, 16
      %17 = vsyncadd [#allocation3], %s16
      %s19 = sshll.u32 [#allocation2], 4
      %s20 = int_to_ptr.vmem [resolvable:$true] %s19
      %22 = dma.hbm_to_vmem [thread:$0]  %s0, 16, %s20, [#allocation3]
    $region5: #{tpu_custom_call.1} parent=1 // pred_fallthru
      _
    // Predicated region
    $region6: #{tpu_custom_call.1} parent=1 // pred_check
      _
    $region7: #{tpu_custom_call.1} parent=1 // pred_check_branch
      %24 = sbr.rel (0) target = $region9
    $region8: #{tpu_custom_call.1} parent=1 // pred_region
      _
    $region9: #{tpu_custom_call.1} parent=1 // pred_fallthru
      _
    // Predicated region
    $region10: #{tpu_custom_call.1} parent=1 // pred_check
      _
    $region11: #{tpu_custom_call.1} parent=1 // pred_check_branch
      %26 = sbr.rel (0) target = $region13
    $region12: #{tpu_custom_call.1} parent=1 // pred_region
      _
    $region13: #{tpu_custom_call.1} parent=1 // pred_fallthru
      _
    // Predicated region
    $region14: #{tpu_custom_call.1} parent=1 // pred_check
      _
    $region15: #{tpu_custom_call.1} parent=1 // pred_check_branch
      %28 = sbr.rel (0) target = $region17
    $region16: #{tpu_custom_call.1} parent=1 // pred_region
      %s30 = ssub.s32 512, 512
      %31 = vsyncadd [#allocation6], %s30
      %s32 = sshll.u32 [#allocation5], 4
      %s33 = int_to_ptr.vmem [resolvable:$true] %s32
      %38 = dma.hbm_to_vmem [thread:$0]  %s3, 512, %s33, [#allocation6], 128, 128, 8
    $region17: #{tpu_custom_call.1} parent=1 // pred_fallthru
      _
    // Predicated region
    $region18: #{tpu_custom_call.1} parent=1 // pred_check
      _
    $region19: #{tpu_custom_call.1} parent=1 // pred_check_branch
      %40 = sbr.rel (0) target = $region21
    $region20: #{tpu_custom_call.1} parent=1 // pred_region
      %s42 = ssub.s32 512, 512
      %43 = vsyncadd [#allocation6], %s42
      %s44 = sshll.u32 [#allocation7], 4
      %s45 = int_to_ptr.vmem [resolvable:$true] %s44
      %50 = dma.hbm_to_vmem [thread:$0]  %s4, 512, %s45, [#allocation6], 128, 128, 8
    $region21: #{tpu_custom_call.1} parent=1 // pred_fallthru
      _
    // Predicated region
    $region22: #{tpu_custom_call.1} parent=1 // pred_check
      _
    $region23: #{tpu_custom_call.1} parent=1 // pred_check_branch
      %52 = sbr.rel (0) target = $region25
    $region24: #{tpu_custom_call.1} parent=1 // pred_region
      %53 = dma.done [#allocation3], 16
    $region25: #{tpu_custom_call.1} parent=1 // pred_fallthru
      _
    // Predicated region
    $region26: #{tpu_custom_call.1} parent=1 // pred_check
      _
    $region27: #{tpu_custom_call.1} parent=1 // pred_check_branch
      %55 = sbr.rel (0) target = $region29
    $region28: #{tpu_custom_call.1} parent=1 // pred_region
      %56 = dma.done [#allocation6], 512
    $region29: #{tpu_custom_call.1} parent=1 // pred_fallthru
      _
    // Predicated region
    $region30: #{tpu_custom_call.1} parent=1 // pred_check
      _
    $region31: #{tpu_custom_call.1} parent=1 // pred_check_branch
      %58 = sbr.rel (0) target = $region33
    $region32: #{tpu_custom_call.1} parent=1 // pred_region
      %59 = dma.done [#allocation6], 512
    $region33: #{tpu_custom_call.1} parent=1 // pred_fallthru
      _
    %v60 = vld [vmem:[#allocation5] sm:$0xff]
    %v61 = vld [vmem:[#allocation5 + $0x8] sm:$0xff]
    %v62 = vld [vmem:[#allocation5 + $0x10] sm:$0xff]
    %v63 = vld [vmem:[#allocation5 + $0x18] sm:$0xff]
    %v64 = vld [vmem:[#allocation7] sm:$0xff]
    %v65 = vld [vmem:[#allocation7 + $0x8] sm:$0xff]
    %v66 = vld [vmem:[#allocation7 + $0x10] sm:$0xff]
    %v67 = vld [vmem:[#allocation7 + $0x18] sm:$0xff]
    %v68 = vlaneseq
    %v69 = vshrl.u32 %v68, 7
    %v70 = vadd.s32 %v69, 8
    %v71 = vadd.s32 %v69, 16
    %v72 = vadd.s32 %v69, 24
    %v73 = vadd.s32 %v69, 32
    %v74 = vadd.s32 %v69, 40
    %v75 = vadd.s32 %v69, 48
    %v76 = vld [vmem:[#allocation2] sm:$0x1]
    %v77 = vlaneseq
    %v78 = vshrl.u32 %v77, 7
    %v79 = vsub.s32 0, %v78
    %v80 = vrot.slane %v76, %v79
    %vm81 = vcmp.eq.s32.totalorder %v69, %v80
    %vm82 = vcmp.eq.s32.totalorder %v70, %v80
    %vm83 = vcmp.eq.s32.totalorder %v71, %v80
    %vm84 = vcmp.eq.s32.totalorder %v72, %v80
    %vm85 = vcmp.eq.s32.totalorder %v73, %v80
    %vm86 = vcmp.eq.s32.totalorder %v74, %v80
    %vm87 = vcmp.eq.s32.totalorder %v75, %v80
    %v88 = vsel %vm81, 1, 0
    %v89 = vsel %vm82, 1, 0
    %v90 = vsel %vm83, 1, 0
    %v91 = vsel %vm84, 1, 0
    %v92 = vsel %vm85, 1, 0
    %v93 = vsel %vm86, 1, 0
    %v94 = vsel %vm87, 1, 0
    %v95 = vcvt.s32.f32 %v88
    %v96 = vcvt.s32.f32 %v89
    %v97 = vcvt.s32.f32 %v90
    %v98 = vcvt.s32.f32 %v91
    %v99 = vcvt.s32.f32 %v92
    %v100 = vcvt.s32.f32 %v93
    %v101 = vcvt.s32.f32 %v94
    %vm102 = vcmask 408576
    %v104 = vsel %vm102, %v60, 0
    %v107 = vsel %vm102, %v61, 0
    %v110 = vsel %vm102, %v62, 0
    %v113 = vsel %vm102, %v63, 0
    %vm115 = vcmask 1041408
    %v117 = vsel %vm115, %v101, 0
    %119 = vmatprep.subr.mxu0 0.0
    %120 = vmatpush1.msra.mxu0 %v95
    %121 = vmatprep.subr.mxu0 0.0
    %122 = vmatpush1.msra.mxu0 %v96
    %123 = vmatprep.subr.mxu0 0.0
    %124 = vmatpush1.msra.mxu0 %v97
    %125 = vmatprep.subr.mxu0 0.0
    %126 = vmatpush1.msra.mxu0 %v98
    %127 = vmatprep.subr.mxu0 0.0
    %128 = vmatpush1.msra.mxu0 %v99
    %129 = vmatprep.subr.mxu0 0.0
    %130 = vmatpush1.msra.mxu0 %v100
    %131 = vmatprep.subr.mxu0 0.0
    %132 = vmatpush1.msra.mxu0 %v117
    %133 = vmatprep.subr.mxu0 0.0
    %134 = vmatpush1.msra.mxu0 0.0
    %135 = vmatprep.subr.mxu0 0.0
    %136 = vmatpush1.msra.mxu0 0.0
    %137 = vmatprep.subr.mxu0 0.0
    %138 = vmatpush1.msra.mxu0 0.0
    %139 = vmatprep.subr.mxu0 0.0
    %140 = vmatpush1.msra.mxu0 0.0
    %141 = vmatprep.subr.mxu0 0.0
    %142 = vmatpush1.msra.mxu0 0.0
    %143 = vmatprep.subr.mxu0 0.0
    %144 = vmatpush1.msra.mxu0 0.0
    %145 = vmatprep.subr.mxu0 0.0
    %146 = vmatpush1.msra.mxu0 0.0
    %147 = vmatprep.subr.mxu0 0.0
    %148 = vmatpush1.msra.mxu0 0.0
    %149 = vmatprep.subr.mxu0 0.0
    %150 = vmatpush1.msra.mxu0 0.0
    %151 = vmatprep.subr.mxu0 0.0
    %152 = vmatpush1.msra.mxu0 0.0
    %153 = vmatprep.subr.mxu0 0.0
    %154 = vmatpush1.msra.mxu0 0.0
    %155 = vmatprep.subr.mxu0 0.0
    %156 = vmatpush1.msra.mxu0 0.0
    %157 = vmatprep.subr.mxu0 0.0
    %158 = vmatpush1.msra.mxu0 0.0
    %159 = vmatprep.subr.mxu0 0.0
    %160 = vmatpush1.msra.mxu0 0.0
    %161 = vmatprep.subr.mxu0 0.0
    %162 = vmatpush1.msra.mxu0 0.0
    %163 = vmatprep.subr.mxu0 0.0
    %164 = vmatpush1.msra.mxu0 0.0
    %165 = vmatprep.subr.mxu0 0.0
    %166 = vmatpush1.msra.mxu0 0.0
    %167 = vmatprep.subr.mxu0 0.0
    %168 = vmatpush1.msra.mxu0 0.0
    %169 = vmatprep.subr.mxu0 0.0
    %170 = vmatpush1.msra.mxu0 0.0
    %171 = vmatprep.subr.mxu0 0.0
    %172 = vmatpush1.msra.mxu0 0.0
    %173 = vmatprep.subr.mxu0 0.0
    %174 = vmatpush1.msra.mxu0 0.0
    %175 = vmatprep.subr.mxu0 0.0
    %176 = vmatpush1.msra.mxu0 0.0
    %177 = vmatprep.subr.mxu0 0.0
    %178 = vmatpush1.msra.mxu0 0.0
    %179 = vmatprep.subr.mxu0 0.0
    %180 = vmatpush1.msra.mxu0 0.0
    %181 = vmatprep.subr.mxu0 0.0
    %182 = vmatpush1.msra.mxu0 0.0
    %183 = vmatprep.mubr.f32.mxu0 0.0
    %184 = vmatmul.mubr.f32.gmra.mrb[0].mxu0 %v104
    %v185 = vpop.f32.mrb[0].mxu0
    %v186 = vadd.f32 0.0, %v185
    %v187 = vpop.f32.mrb[0].mxu0
    %188 = vmatprep.mubr.f32.mxu0 0.0
    %189 = vmatmul.mubr.f32.gmra.mrb[0].mxu0 %v107
    %v190 = vpop.f32.mrb[0].mxu0
    %v191 = vadd.f32 0.0, %v190
    %v192 = vpop.f32.mrb[0].mxu0
    %193 = vmatprep.mubr.f32.mxu0 0.0
    %194 = vmatmul.mubr.f32.gmra.mrb[0].mxu0 %v110
    %v195 = vpop.f32.mrb[0].mxu0
    %v196 = vadd.f32 0.0, %v195
    %v197 = vpop.f32.mrb[0].mxu0
    %198 = vmatprep.mubr.f32.mxu0 0.0
    %199 = vmatmul.mubr.f32.gmra.mrb[0].mxu0 %v113
    %v200 = vpop.f32.mrb[0].mxu0
    %v201 = vadd.f32 0.0, %v200
    %v202 = vpop.f32.mrb[0].mxu0
    %203 = vdwg.mxu0
    %v204 = vld [vmem:[%s1] sm:$0x1]
    %v205 = vlaneseq
    %v206 = vshrl.u32 %v205, 7
    %v207 = vsub.s32 0, %v206
    %v208 = vrot.slane %v204, %v207
    %vm209 = vcmp.eq.s32.totalorder %v69, %v208
    %vm210 = vcmp.eq.s32.totalorder %v70, %v208
    %vm211 = vcmp.eq.s32.totalorder %v71, %v208
    %vm212 = vcmp.eq.s32.totalorder %v72, %v208
    %vm213 = vcmp.eq.s32.totalorder %v73, %v208
    %vm214 = vcmp.eq.s32.totalorder %v74, %v208
    %vm215 = vcmp.eq.s32.totalorder %v75, %v208
    %v216 = vsel %vm209, 1, 0
    %v217 = vsel %vm210, 1, 0
    %v218 = vsel %vm211, 1, 0
    %v219 = vsel %vm212, 1, 0
    %v220 = vsel %vm213, 1, 0
    %v221 = vsel %vm214, 1, 0
    %v222 = vsel %vm215, 1, 0
    %v223 = vcvt.s32.f32 %v216
    %v224 = vcvt.s32.f32 %v217
    %v225 = vcvt.s32.f32 %v218
    %v226 = vcvt.s32.f32 %v219
    %v227 = vcvt.s32.f32 %v220
    %v228 = vcvt.s32.f32 %v221
    %v229 = vcvt.s32.f32 %v222
    %v231 = vsel %vm102, %v64, 0
    %v234 = vsel %vm102, %v65, 0
    %v237 = vsel %vm102, %v66, 0
    %v240 = vsel %vm102, %v67, 0
    %v243 = vsel %vm115, %v229, 0
    %245 = vmatprep.subr.mxu0 0.0
    %246 = vmatpush1.msra.mxu0 %v223
    %247 = vmatprep.subr.mxu0 0.0
    %248 = vmatpush1.msra.mxu0 %v224
    %249 = vmatprep.subr.mxu0 0.0
    %250 = vmatpush1.msra.mxu0 %v225
    %251 = vmatprep.subr.mxu0 0.0
    %252 = vmatpush1.msra.mxu0 %v226
    %253 = vmatprep.subr.mxu0 0.0
    %254 = vmatpush1.msra.mxu0 %v227
    %255 = vmatprep.subr.mxu0 0.0
    %256 = vmatpush1.msra.mxu0 %v228
    %257 = vmatprep.subr.mxu0 0.0
    %258 = vmatpush1.msra.mxu0 %v243
    %259 = vmatprep.subr.mxu0 0.0
    %260 = vmatpush1.msra.mxu0 0.0
    %261 = vmatprep.subr.mxu0 0.0
    %262 = vmatpush1.msra.mxu0 0.0
    %263 = vmatprep.subr.mxu0 0.0
    %264 = vmatpush1.msra.mxu0 0.0
    %265 = vmatprep.subr.mxu0 0.0
    %266 = vmatpush1.msra.mxu0 0.0
    %267 = vmatprep.subr.mxu0 0.0
    %268 = vmatpush1.msra.mxu0 0.0
    %269 = vmatprep.subr.mxu0 0.0
    %270 = vmatpush1.msra.mxu0 0.0
    %271 = vmatprep.subr.mxu0 0.0
    %272 = vmatpush1.msra.mxu0 0.0
    %273 = vmatprep.subr.mxu0 0.0
    %274 = vmatpush1.msra.mxu0 0.0
    %275 = vmatprep.subr.mxu0 0.0
    %276 = vmatpush1.msra.mxu0 0.0
    %277 = vmatprep.subr.mxu0 0.0
    %278 = vmatpush1.msra.mxu0 0.0
    %279 = vmatprep.subr.mxu0 0.0
    %280 = vmatpush1.msra.mxu0 0.0
    %281 = vmatprep.subr.mxu0 0.0
    %282 = vmatpush1.msra.mxu0 0.0
    %283 = vmatprep.subr.mxu0 0.0
    %284 = vmatpush1.msra.mxu0 0.0
    %285 = vmatprep.subr.mxu0 0.0
    %286 = vmatpush1.msra.mxu0 0.0
    %287 = vmatprep.subr.mxu0 0.0
    %288 = vmatpush1.msra.mxu0 0.0
    %289 = vmatprep.subr.mxu0 0.0
    %290 = vmatpush1.msra.mxu0 0.0
    %291 = vmatprep.subr.mxu0 0.0
    %292 = vmatpush1.msra.mxu0 0.0
    %293 = vmatprep.subr.mxu0 0.0
    %294 = vmatpush1.msra.mxu0 0.0
    %295 = vmatprep.subr.mxu0 0.0
    %296 = vmatpush1.msra.mxu0 0.0
    %297 = vmatprep.subr.mxu0 0.0
    %298 = vmatpush1.msra.mxu0 0.0
    %299 = vmatprep.subr.mxu0 0.0
    %300 = vmatpush1.msra.mxu0 0.0
    %301 = vmatprep.subr.mxu0 0.0
    %302 = vmatpush1.msra.mxu0 0.0
    %303 = vmatprep.subr.mxu0 0.0
    %304 = vmatpush1.msra.mxu0 0.0
    %305 = vmatprep.subr.mxu0 0.0
    %306 = vmatpush1.msra.mxu0 0.0
    %307 = vmatprep.subr.mxu0 0.0
    %308 = vmatpush1.msra.mxu0 0.0
    %309 = vmatprep.mubr.f32.mxu0 0.0
    %310 = vmatmul.mubr.f32.gmra.mrb[0].mxu0 %v231
    %v311 = vpop.f32.mrb[0].mxu0
    %v312 = vadd.f32 0.0, %v311
    %v313 = vpop.f32.mrb[0].mxu0
    %314 = vmatprep.mubr.f32.mxu0 0.0
    %315 = vmatmul.mubr.f32.gmra.mrb[0].mxu0 %v234
    %v316 = vpop.f32.mrb[0].mxu0
    %v317 = vadd.f32 0.0, %v316
    %v318 = vpop.f32.mrb[0].mxu0
    %319 = vmatprep.mubr.f32.mxu0 0.0
    %320 = vmatmul.mubr.f32.gmra.mrb[0].mxu0 %v237
    %v321 = vpop.f32.mrb[0].mxu0
    %v322 = vadd.f32 0.0, %v321
    %v323 = vpop.f32.mrb[0].mxu0
    %324 = vmatprep.mubr.f32.mxu0 0.0
    %325 = vmatmul.mubr.f32.gmra.mrb[0].mxu0 %v240
    %v326 = vpop.f32.mrb[0].mxu0
    %v327 = vadd.f32 0.0, %v326
    %v328 = vpop.f32.mrb[0].mxu0
    %329 = vdwg.mxu0
    %v330 = vmul.f32 %v186, %v312
    %v331 = vmul.f32 %v191, %v317
    %v332 = vmul.f32 %v196, %v322
    %v333 = vmul.f32 %v201, %v327
    %v334 = vadd.f32 %v330, %v331
    %v335 = vadd.f32 %v334, %v332
    %v336 = vadd.f32 %v335, %v333
    %v337 = vrot.slane %v336, 4
    %v338 = vadd.f32 %v336, %v337
    %v339 = vrot.slane %v338, 2
    %v340 = vadd.f32 %v338, %v339
    %v341 = vrot.slane %v340, 1
    %v342 = vadd.f32 %v340, %v341
    %v343 = vmin.f32 %v342, 0.0
    %v344 = vand.u32 2147483647, %v342
    %v345 = vsub.f32 0.0, %v344
    %v346 = vmul.f32 %v345, 1.442695
    %v347 = vpow.pop %v346
    %v348 = vadd.f32 %v347, 1.0
    %v349 = vlog2.pop %v348
    %v350 = vmul.f32 %v349, 0.6931472
    %v351 = vmul.f32 -0.5, %v347
    %v352 = vadd.f32 %v351, 1.0
    %v353 = vmul.f32 %v352, %v347
    %v354 = vand.u32 2147483647, %v347
    %vm355 = vcmp.lt.f32.partialorder %v354, 0.0004427343
    %v356 = vsel %vm355, %v353, %v350
    %v357 = vsub.f32 %v343, %v356
    %v358 = vld [vmem:[%s2] sm:$0xf]
    %v359 = vlaneseq
    %v360 = vshrl.u32 %v359, 7
    %v361 = vsub.s32 0, %v360
    %v362 = vrot.slane %v358, %v361
    %vm363 = vcmp.eq.s32.totalorder %v69, %v362
    %vm364 = vcmp.eq.s32.totalorder %v70, %v362
    %vm365 = vcmp.eq.s32.totalorder %v71, %v362
    %vm366 = vcmp.eq.s32.totalorder %v72, %v362
    %vm367 = vcmp.eq.s32.totalorder %v73, %v362
    %vm368 = vcmp.eq.s32.totalorder %v74, %v362
    %vm369 = vcmp.eq.s32.totalorder %v75, %v362
    %v370 = vsel %vm363, 1, 0
    %v371 = vsel %vm364, 1, 0
    %v372 = vsel %vm365, 1, 0
    %v373 = vsel %vm366, 1, 0
    %v374 = vsel %vm367, 1, 0
    %v375 = vsel %vm368, 1, 0
    %v376 = vsel %vm369, 1, 0
    %v377 = vcvt.s32.f32 %v370
    %v378 = vcvt.s32.f32 %v371
    %v379 = vcvt.s32.f32 %v372
    %v380 = vcvt.s32.f32 %v373
    %v381 = vcvt.s32.f32 %v374
    %v382 = vcvt.s32.f32 %v375
    %v383 = vcvt.s32.f32 %v376
    %v385 = vsel %vm115, %v383, 0
    %387 = vmatprep.subr.mxu0 0.0
    %388 = vmatpush1.msra.mxu0 %v377
    %389 = vmatprep.subr.mxu0 0.0
    %390 = vmatpush1.msra.mxu0 %v378
    %391 = vmatprep.subr.mxu0 0.0
    %392 = vmatpush1.msra.mxu0 %v379
    %393 = vmatprep.subr.mxu0 0.0
    %394 = vmatpush1.msra.mxu0 %v380
    %395 = vmatprep.subr.mxu0 0.0
    %396 = vmatpush1.msra.mxu0 %v381
    %397 = vmatprep.subr.mxu0 0.0
    %398 = vmatpush1.msra.mxu0 %v382
    %399 = vmatprep.subr.mxu0 0.0
    %400 = vmatpush1.msra.mxu0 %v385
    %401 = vmatprep.subr.mxu0 0.0
    %402 = vmatpush1.msra.mxu0 0.0
    %403 = vmatprep.subr.mxu0 0.0
    %404 = vmatpush1.msra.mxu0 0.0
    %405 = vmatprep.subr.mxu0 0.0
    %406 = vmatpush1.msra.mxu0 0.0
    %407 = vmatprep.subr.mxu0 0.0
    %408 = vmatpush1.msra.mxu0 0.0
    %409 = vmatprep.subr.mxu0 0.0
    %410 = vmatpush1.msra.mxu0 0.0
    %411 = vmatprep.subr.mxu0 0.0
    %412 = vmatpush1.msra.mxu0 0.0
    %413 = vmatprep.subr.mxu0 0.0
    %414 = vmatpush1.msra.mxu0 0.0
    %415 = vmatprep.subr.mxu0 0.0
    %416 = vmatpush1.msra.mxu0 0.0
    %417 = vmatprep.subr.mxu0 0.0
    %418 = vmatpush1.msra.mxu0 0.0
    %419 = vmatprep.subr.mxu0 0.0
    %420 = vmatpush1.msra.mxu0 0.0
    %421 = vmatprep.subr.mxu0 0.0
    %422 = vmatpush1.msra.mxu0 0.0
    %423 = vmatprep.subr.mxu0 0.0
    %424 = vmatpush1.msra.mxu0 0.0
    %425 = vmatprep.subr.mxu0 0.0
    %426 = vmatpush1.msra.mxu0 0.0
    %427 = vmatprep.subr.mxu0 0.0
    %428 = vmatpush1.msra.mxu0 0.0
    %429 = vmatprep.subr.mxu0 0.0
    %430 = vmatpush1.msra.mxu0 0.0
    %431 = vmatprep.subr.mxu0 0.0
    %432 = vmatpush1.msra.mxu0 0.0
    %433 = vmatprep.subr.mxu0 0.0
    %434 = vmatpush1.msra.mxu0 0.0
    %435 = vmatprep.subr.mxu0 0.0
    %436 = vmatpush1.msra.mxu0 0.0
    %437 = vmatprep.subr.mxu0 0.0
    %438 = vmatpush1.msra.mxu0 0.0
    %439 = vmatprep.subr.mxu0 0.0
    %440 = vmatpush1.msra.mxu0 0.0
    %441 = vmatprep.subr.mxu0 0.0
    %442 = vmatpush1.msra.mxu0 0.0
    %443 = vmatprep.subr.mxu0 0.0
    %444 = vmatpush1.msra.mxu0 0.0
    %445 = vmatprep.subr.mxu0 0.0
    %446 = vmatpush1.msra.mxu0 0.0
    %447 = vmatprep.subr.mxu0 0.0
    %448 = vmatpush1.msra.mxu0 0.0
    %449 = vmatprep.subr.mxu0 0.0
    %450 = vmatpush1.msra.mxu0 0.0
    %451 = vmatprep.mubr.f32.mxu0 0.0
    %452 = vmatmul.mubr.f32.gmra.mrb[0].mxu0 %v231
    %v453 = vpop.f32.mrb[0].mxu0
    %v454 = vadd.f32 0.0, %v453
    %v455 = vpop.f32.mrb[0].mxu0
    %456 = vmatprep.mubr.f32.mxu0 0.0
    %457 = vmatmul.mubr.f32.gmra.mrb[0].mxu0 %v234
    %v458 = vpop.f32.mrb[0].mxu0
    %v459 = vadd.f32 0.0, %v458
    %v460 = vpop.f32.mrb[0].mxu0
    %461 = vmatprep.mubr.f32.mxu0 0.0
    %462 = vmatmul.mubr.f32.gmra.mrb[0].mxu0 %v237
    %v463 = vpop.f32.mrb[0].mxu0
    %v464 = vadd.f32 0.0, %v463
    %v465 = vpop.f32.mrb[0].mxu0
    %466 = vmatprep.mubr.f32.mxu0 0.0
    %467 = vmatmul.mubr.f32.gmra.mrb[0].mxu0 %v240
    %v468 = vpop.f32.mrb[0].mxu0
    %v469 = vadd.f32 0.0, %v468
    %v470 = vpop.f32.mrb[0].mxu0
    %471 = vdwg.mxu0
    %v472 = vmul.f32 %v186, %v454
    %v473 = vmul.f32 %v191, %v459
    %v474 = vmul.f32 %v196, %v464
    %v475 = vmul.f32 %v201, %v469
    %v476 = vadd.f32 %v472, %v473
    %v477 = vadd.f32 %v476, %v474
    %v478 = vadd.f32 %v477, %v475
    %v479 = vrot.slane %v478, 4
    %v480 = vadd.f32 %v478, %v479
    %v481 = vrot.slane %v480, 2
    %v482 = vadd.f32 %v480, %v481
    %v483 = vrot.slane %v482, 1
    %v484 = vadd.f32 %v482, %v483
    %v485 = vsub.f32 0.0, %v484
    %v486 = vmin.f32 %v485, 0.0
    %v487 = vand.u32 2147483647, %v485
    %v488 = vsub.f32 0.0, %v487
    %v489 = vmul.f32 %v488, 1.442695
    %v490 = vpow.pop %v489
    %v491 = vadd.f32 %v490, 1.0
    %v492 = vlog2.pop %v491
    %v493 = vmul.f32 %v492, 0.6931472
    %v494 = vmul.f32 -0.5, %v490
    %v495 = vadd.f32 %v494, 1.0
    %v496 = vmul.f32 %v495, %v490
    %v497 = vand.u32 2147483647, %v490
    %vm498 = vcmp.lt.f32.partialorder %v497, 0.0004427343
    %v499 = vsel %vm498, %v496, %v493
    %v500 = vsub.f32 %v486, %v499
    %v501 = vadd.f32 %v357, %v500
    %v502 = vlaneseq
    %v503 = vshrl.u32 %v502, 7
    %v504 = vsub.s32 1, %v503
    %v505 = vrot.slane %v358, %v504
    %vm506 = vcmp.eq.s32.totalorder %v69, %v505
    %vm507 = vcmp.eq.s32.totalorder %v70, %v505
    %vm508 = vcmp.eq.s32.totalorder %v71, %v505
    %vm509 = vcmp.eq.s32.totalorder %v72, %v505
    %vm510 = vcmp.eq.s32.totalorder %v73, %v505
    %vm511 = vcmp.eq.s32.totalorder %v74, %v505
    %vm512 = vcmp.eq.s32.totalorder %v75, %v505
    %v513 = vsel %vm506, 1, 0
    %v514 = vsel %vm507, 1, 0
    %v515 = vsel %vm508, 1, 0
    %v516 = vsel %vm509, 1, 0
    %v517 = vsel %vm510, 1, 0
    %v518 = vsel %vm511, 1, 0
    %v519 = vsel %vm512, 1, 0
    %v520 = vcvt.s32.f32 %v513
    %v521 = vcvt.s32.f32 %v514
    %v522 = vcvt.s32.f32 %v515
    %v523 = vcvt.s32.f32 %v516
    %v524 = vcvt.s32.f32 %v517
    %v525 = vcvt.s32.f32 %v518
    %v526 = vcvt.s32.f32 %v519
    %v528 = vsel %vm115, %v526, 0
    %530 = vmatprep.subr.mxu0 0.0
    %531 = vmatpush1.msra.mxu0 %v520
    %532 = vmatprep.subr.mxu0 0.0
    %533 = vmatpush1.msra.mxu0 %v521
    %534 = vmatprep.subr.mxu0 0.0
    %535 = vmatpush1.msra.mxu0 %v522
    %536 = vmatprep.subr.mxu0 0.0
    %537 = vmatpush1.msra.mxu0 %v523
    %538 = vmatprep.subr.mxu0 0.0
    %539 = vmatpush1.msra.mxu0 %v524
    %540 = vmatprep.subr.mxu0 0.0
    %541 = vmatpush1.msra.mxu0 %v525
    %542 = vmatprep.subr.mxu0 0.0
    %543 = vmatpush1.msra.mxu0 %v528
    %544 = vmatprep.subr.mxu0 0.0
    %545 = vmatpush1.msra.mxu0 0.0
    %546 = vmatprep.subr.mxu0 0.0
    %547 = vmatpush1.msra.mxu0 0.0
    %548 = vmatprep.subr.mxu0 0.0
    %549 = vmatpush1.msra.mxu0 0.0
    %550 = vmatprep.subr.mxu0 0.0
    %551 = vmatpush1.msra.mxu0 0.0
    %552 = vmatprep.subr.mxu0 0.0
    %553 = vmatpush1.msra.mxu0 0.0
    %554 = vmatprep.subr.mxu0 0.0
    %555 = vmatpush1.msra.mxu0 0.0
    %556 = vmatprep.subr.mxu0 0.0
    %557 = vmatpush1.msra.mxu0 0.0
    %558 = vmatprep.subr.mxu0 0.0
    %559 = vmatpush1.msra.mxu0 0.0
    %560 = vmatprep.subr.mxu0 0.0
    %561 = vmatpush1.msra.mxu0 0.0
    %562 = vmatprep.subr.mxu0 0.0
    %563 = vmatpush1.msra.mxu0 0.0
    %564 = vmatprep.subr.mxu0 0.0
    %565 = vmatpush1.msra.mxu0 0.0
    %566 = vmatprep.subr.mxu0 0.0
    %567 = vmatpush1.msra.mxu0 0.0
    %568 = vmatprep.subr.mxu0 0.0
    %569 = vmatpush1.msra.mxu0 0.0
    %570 = vmatprep.subr.mxu0 0.0
    %571 = vmatpush1.msra.mxu0 0.0
    %572 = vmatprep.subr.mxu0 0.0
    %573 = vmatpush1.msra.mxu0 0.0
    %574 = vmatprep.subr.mxu0 0.0
    %575 = vmatpush1.msra.mxu0 0.0
    %576 = vmatprep.subr.mxu0 0.0
    %577 = vmatpush1.msra.mxu0 0.0
    %578 = vmatprep.subr.mxu0 0.0
    %579 = vmatpush1.msra.mxu0 0.0
    %580 = vmatprep.subr.mxu0 0.0
    %581 = vmatpush1.msra.mxu0 0.0
    %582 = vmatprep.subr.mxu0 0.0
    %583 = vmatpush1.msra.mxu0 0.0
    %584 = vmatprep.subr.mxu0 0.0
    %585 = vmatpush1.msra.mxu0 0.0
    %586 = vmatprep.subr.mxu0 0.0
    %587 = vmatpush1.msra.mxu0 0.0
    %588 = vmatprep.subr.mxu0 0.0
    %589 = vmatpush1.msra.mxu0 0.0
    %590 = vmatprep.subr.mxu0 0.0
    %591 = vmatpush1.msra.mxu0 0.0
    %592 = vmatprep.subr.mxu0 0.0
    %593 = vmatpush1.msra.mxu0 0.0
    %594 = vmatprep.mubr.f32.mxu0 0.0
    %595 = vmatmul.mubr.f32.gmra.mrb[0].mxu0 %v231
    %v596 = vpop.f32.mrb[0].mxu0
    %v597 = vadd.f32 0.0, %v596
    %v598 = vpop.f32.mrb[0].mxu0
    %599 = vmatprep.mubr.f32.mxu0 0.0
    %600 = vmatmul.mubr.f32.gmra.mrb[0].mxu0 %v234
    %v601 = vpop.f32.mrb[0].mxu0
    %v602 = vadd.f32 0.0, %v601
    %v603 = vpop.f32.mrb[0].mxu0
    %604 = vmatprep.mubr.f32.mxu0 0.0
    %605 = vmatmul.mubr.f32.gmra.mrb[0].mxu0 %v237
    %v606 = vpop.f32.mrb[0].mxu0
    %v607 = vadd.f32 0.0, %v606
    %v608 = vpop.f32.mrb[0].mxu0
    %609 = vmatprep.mubr.f32.mxu0 0.0
    %610 = vmatmul.mubr.f32.gmra.mrb[0].mxu0 %v240
    %v611 = vpop.f32.mrb[0].mxu0
    %v612 = vadd.f32 0.0, %v611
    %v613 = vpop.f32.mrb[0].mxu0
    %614 = vdwg.mxu0
    %v615 = vmul.f32 %v186, %v597
    %v616 = vmul.f32 %v191, %v602
    %v617 = vmul.f32 %v196, %v607
    %v618 = vmul.f32 %v201, %v612
    %v619 = vadd.f32 %v615, %v616
    %v620 = vadd.f32 %v619, %v617
    %v621 = vadd.f32 %v620, %v618
    %v622 = vrot.slane %v621, 4
    %v623 = vadd.f32 %v621, %v622
    %v624 = vrot.slane %v623, 2
    %v625 = vadd.f32 %v623, %v624
    %v626 = vrot.slane %v625, 1
    %v627 = vadd.f32 %v625, %v626
    %v628 = vsub.f32 0.0, %v627
    %v629 = vmin.f32 %v628, 0.0
    %v630 = vand.u32 2147483647, %v628
    %v631 = vsub.f32 0.0, %v630
    %v632 = vmul.f32 %v631, 1.442695
    %v633 = vpow.pop %v632
    %v634 = vadd.f32 %v633, 1.0
    %v635 = vlog2.pop %v634
    %v636 = vmul.f32 %v635, 0.6931472
    %v637 = vmul.f32 -0.5, %v633
    %v638 = vadd.f32 %v637, 1.0
    %v639 = vmul.f32 %v638, %v633
    %v640 = vand.u32 2147483647, %v633
    %vm641 = vcmp.lt.f32.partialorder %v640, 0.0004427343
    %v642 = vsel %vm641, %v639, %v636
    %v643 = vsub.f32 %v629, %v642
    %v644 = vadd.f32 %v501, %v643
    %v645 = vlaneseq
    %v646 = vshrl.u32 %v645, 7
    %v647 = vsub.s32 2, %v646
    %v648 = vrot.slane %v358, %v647
    %vm649 = vcmp.eq.s32.totalorder %v69, %v648
    %vm650 = vcmp.eq.s32.totalorder %v70, %v648
    %vm651 = vcmp.eq.s32.totalorder %v71, %v648
    %vm652 = vcmp.eq.s32.totalorder %v72, %v648
    %vm653 = vcmp.eq.s32.totalorder %v73, %v648
    %vm654 = vcmp.eq.s32.totalorder %v74, %v648
    %vm655 = vcmp.eq.s32.totalorder %v75, %v648
    %v656 = vsel %vm649, 1, 0
    %v657 = vsel %vm650, 1, 0
    %v658 = vsel %vm651, 1, 0
    %v659 = vsel %vm652, 1, 0
    %v660 = vsel %vm653, 1, 0
    %v661 = vsel %vm654, 1, 0
    %v662 = vsel %vm655, 1, 0
    %v663 = vcvt.s32.f32 %v656
    %v664 = vcvt.s32.f32 %v657
    %v665 = vcvt.s32.f32 %v658
    %v666 = vcvt.s32.f32 %v659
    %v667 = vcvt.s32.f32 %v660
    %v668 = vcvt.s32.f32 %v661
    %v669 = vcvt.s32.f32 %v662
    %v671 = vsel %vm115, %v669, 0
    %673 = vmatprep.subr.mxu0 0.0
    %674 = vmatpush1.msra.mxu0 %v663
    %675 = vmatprep.subr.mxu0 0.0
    %676 = vmatpush1.msra.mxu0 %v664
    %677 = vmatprep.subr.mxu0 0.0
    %678 = vmatpush1.msra.mxu0 %v665
    %679 = vmatprep.subr.mxu0 0.0
    %680 = vmatpush1.msra.mxu0 %v666
    %681 = vmatprep.subr.mxu0 0.0
    %682 = vmatpush1.msra.mxu0 %v667
    %683 = vmatprep.subr.mxu0 0.0
    %684 = vmatpush1.msra.mxu0 %v668
    %685 = vmatprep.subr.mxu0 0.0
    %686 = vmatpush1.msra.mxu0 %v671
    %687 = vmatprep.subr.mxu0 0.0
    %688 = vmatpush1.msra.mxu0 0.0
    %689 = vmatprep.subr.mxu0 0.0
    %690 = vmatpush1.msra.mxu0 0.0
    %691 = vmatprep.subr.mxu0 0.0
    %692 = vmatpush1.msra.mxu0 0.0
    %693 = vmatprep.subr.mxu0 0.0
    %694 = vmatpush1.msra.mxu0 0.0
    %695 = vmatprep.subr.mxu0 0.0
    %696 = vmatpush1.msra.mxu0 0.0
    %697 = vmatprep.subr.mxu0 0.0
    %698 = vmatpush1.msra.mxu0 0.0
    %699 = vmatprep.subr.mxu0 0.0
    %700 = vmatpush1.msra.mxu0 0.0
    %701 = vmatprep.subr.mxu0 0.0
    %702 = vmatpush1.msra.mxu0 0.0
    %703 = vmatprep.subr.mxu0 0.0
    %704 = vmatpush1.msra.mxu0 0.0
    %705 = vmatprep.subr.mxu0 0.0
    %706 = vmatpush1.msra.mxu0 0.0
    %707 = vmatprep.subr.mxu0 0.0
    %708 = vmatpush1.msra.mxu0 0.0
    %709 = vmatprep.subr.mxu0 0.0
    %710 = vmatpush1.msra.mxu0 0.0
    %711 = vmatprep.subr.mxu0 0.0
    %712 = vmatpush1.msra.mxu0 0.0
    %713 = vmatprep.subr.mxu0 0.0
    %714 = vmatpush1.msra.mxu0 0.0
    %715 = vmatprep.subr.mxu0 0.0
    %716 = vmatpush1.msra.mxu0 0.0
    %717 = vmatprep.subr.mxu0 0.0
    %718 = vmatpush1.msra.mxu0 0.0
    %719 = vmatprep.subr.mxu0 0.0
    %720 = vmatpush1.msra.mxu0 0.0
    %721 = vmatprep.subr.mxu0 0.0
    %722 = vmatpush1.msra.mxu0 0.0
    %723 = vmatprep.subr.mxu0 0.0
    %724 = vmatpush1.msra.mxu0 0.0
    %725 = vmatprep.subr.mxu0 0.0
    %726 = vmatpush1.msra.mxu0 0.0
    %727 = vmatprep.subr.mxu0 0.0
    %728 = vmatpush1.msra.mxu0 0.0
    %729 = vmatprep.subr.mxu0 0.0
    %730 = vmatpush1.msra.mxu0 0.0
    %731 = vmatprep.subr.mxu0 0.0
    %732 = vmatpush1.msra.mxu0 0.0
    %733 = vmatprep.subr.mxu0 0.0
    %734 = vmatpush1.msra.mxu0 0.0
    %735 = vmatprep.subr.mxu0 0.0
    %736 = vmatpush1.msra.mxu0 0.0
    %737 = vmatprep.mubr.f32.mxu0 0.0
    %738 = vmatmul.mubr.f32.gmra.mrb[0].mxu0 %v231
    %v739 = vpop.f32.mrb[0].mxu0
    %v740 = vadd.f32 0.0, %v739
    %v741 = vpop.f32.mrb[0].mxu0
    %742 = vmatprep.mubr.f32.mxu0 0.0
    %743 = vmatmul.mubr.f32.gmra.mrb[0].mxu0 %v234
    %v744 = vpop.f32.mrb[0].mxu0
    %v745 = vadd.f32 0.0, %v744
    %v746 = vpop.f32.mrb[0].mxu0
    %747 = vmatprep.mubr.f32.mxu0 0.0
    %748 = vmatmul.mubr.f32.gmra.mrb[0].mxu0 %v237
    %v749 = vpop.f32.mrb[0].mxu0
    %v750 = vadd.f32 0.0, %v749
    %v751 = vpop.f32.mrb[0].mxu0
    %752 = vmatprep.mubr.f32.mxu0 0.0
    %753 = vmatmul.mubr.f32.gmra.mrb[0].mxu0 %v240
    %v754 = vpop.f32.mrb[0].mxu0
    %v755 = vadd.f32 0.0, %v754
    %v756 = vpop.f32.mrb[0].mxu0
    %757 = vdwg.mxu0
    %v758 = vmul.f32 %v186, %v740
    %v759 = vmul.f32 %v191, %v745
    %v760 = vmul.f32 %v196, %v750
    %v761 = vmul.f32 %v201, %v755
    %v762 = vadd.f32 %v758, %v759
    %v763 = vadd.f32 %v762, %v760
    %v764 = vadd.f32 %v763, %v761
    %v765 = vrot.slane %v764, 4
    %v766 = vadd.f32 %v764, %v765
    %v767 = vrot.slane %v766, 2
    %v768 = vadd.f32 %v766, %v767
    %v769 = vrot.slane %v768, 1
    %v770 = vadd.f32 %v768, %v769
    %v771 = vsub.f32 0.0, %v770
    %v772 = vmin.f32 %v771, 0.0
    %v773 = vand.u32 2147483647, %v771
    %v774 = vsub.f32 0.0, %v773
    %v775 = vmul.f32 %v774, 1.442695
    %v776 = vpow.pop %v775
    %v777 = vadd.f32 %v776, 1.0
    %v778 = vlog2.pop %v777
    %v779 = vmul.f32 %v778, 0.6931472
    %v780 = vmul.f32 -0.5, %v776
    %v781 = vadd.f32 %v780, 1.0
    %v782 = vmul.f32 %v781, %v776
    %v783 = vand.u32 2147483647, %v776
    %vm784 = vcmp.lt.f32.partialorder %v783, 0.0004427343
    %v785 = vsel %vm784, %v782, %v779
    %v786 = vsub.f32 %v772, %v785
    %v787 = vadd.f32 %v644, %v786
    %v788 = vlaneseq
    %v789 = vshrl.u32 %v788, 7
    %v790 = vsub.s32 3, %v789
    %v791 = vrot.slane %v358, %v790
    %vm792 = vcmp.eq.s32.totalorder %v69, %v791
    %vm793 = vcmp.eq.s32.totalorder %v70, %v791
    %vm794 = vcmp.eq.s32.totalorder %v71, %v791
    %vm795 = vcmp.eq.s32.totalorder %v72, %v791
    %vm796 = vcmp.eq.s32.totalorder %v73, %v791
    %vm797 = vcmp.eq.s32.totalorder %v74, %v791
    %vm798 = vcmp.eq.s32.totalorder %v75, %v791
    %v799 = vsel %vm792, 1, 0
    %v800 = vsel %vm793, 1, 0
    %v801 = vsel %vm794, 1, 0
    %v802 = vsel %vm795, 1, 0
    %v803 = vsel %vm796, 1, 0
    %v804 = vsel %vm797, 1, 0
    %v805 = vsel %vm798, 1, 0
    %v806 = vcvt.s32.f32 %v799
    %v807 = vcvt.s32.f32 %v800
    %v808 = vcvt.s32.f32 %v801
    %v809 = vcvt.s32.f32 %v802
    %v810 = vcvt.s32.f32 %v803
    %v811 = vcvt.s32.f32 %v804
    %v812 = vcvt.s32.f32 %v805
    %v814 = vsel %vm115, %v812, 0
    %816 = vmatprep.subr.mxu0 0.0
    %817 = vmatpush1.msra.mxu0 %v806
    %818 = vmatprep.subr.mxu0 0.0
    %819 = vmatpush1.msra.mxu0 %v807
    %820 = vmatprep.subr.mxu0 0.0
    %821 = vmatpush1.msra.mxu0 %v808
    %822 = vmatprep.subr.mxu0 0.0
    %823 = vmatpush1.msra.mxu0 %v809
    %824 = vmatprep.subr.mxu0 0.0
    %825 = vmatpush1.msra.mxu0 %v810
    %826 = vmatprep.subr.mxu0 0.0
    %827 = vmatpush1.msra.mxu0 %v811
    %828 = vmatprep.subr.mxu0 0.0
    %829 = vmatpush1.msra.mxu0 %v814
    %830 = vmatprep.subr.mxu0 0.0
    %831 = vmatpush1.msra.mxu0 0.0
    %832 = vmatprep.subr.mxu0 0.0
    %833 = vmatpush1.msra.mxu0 0.0
    %834 = vmatprep.subr.mxu0 0.0
    %835 = vmatpush1.msra.mxu0 0.0
    %836 = vmatprep.subr.mxu0 0.0
    %837 = vmatpush1.msra.mxu0 0.0
    %838 = vmatprep.subr.mxu0 0.0
    %839 = vmatpush1.msra.mxu0 0.0
    %840 = vmatprep.subr.mxu0 0.0
    %841 = vmatpush1.msra.mxu0 0.0
    %842 = vmatprep.subr.mxu0 0.0
    %843 = vmatpush1.msra.mxu0 0.0
    %844 = vmatprep.subr.mxu0 0.0
    %845 = vmatpush1.msra.mxu0 0.0
    %846 = vmatprep.subr.mxu0 0.0
    %847 = vmatpush1.msra.mxu0 0.0
    %848 = vmatprep.subr.mxu0 0.0
    %849 = vmatpush1.msra.mxu0 0.0
    %850 = vmatprep.subr.mxu0 0.0
    %851 = vmatpush1.msra.mxu0 0.0
    %852 = vmatprep.subr.mxu0 0.0
    %853 = vmatpush1.msra.mxu0 0.0
    %854 = vmatprep.subr.mxu0 0.0
    %855 = vmatpush1.msra.mxu0 0.0
    %856 = vmatprep.subr.mxu0 0.0
    %857 = vmatpush1.msra.mxu0 0.0
    %858 = vmatprep.subr.mxu0 0.0
    %859 = vmatpush1.msra.mxu0 0.0
    %860 = vmatprep.subr.mxu0 0.0
    %861 = vmatpush1.msra.mxu0 0.0
    %862 = vmatprep.subr.mxu0 0.0
    %863 = vmatpush1.msra.mxu0 0.0
    %864 = vmatprep.subr.mxu0 0.0
    %865 = vmatpush1.msra.mxu0 0.0
    %866 = vmatprep.subr.mxu0 0.0
    %867 = vmatpush1.msra.mxu0 0.0
    %868 = vmatprep.subr.mxu0 0.0
    %869 = vmatpush1.msra.mxu0 0.0
    %870 = vmatprep.subr.mxu0 0.0
    %871 = vmatpush1.msra.mxu0 0.0
    %872 = vmatprep.subr.mxu0 0.0
    %873 = vmatpush1.msra.mxu0 0.0
    %874 = vmatprep.subr.mxu0 0.0
    %875 = vmatpush1.msra.mxu0 0.0
    %876 = vmatprep.subr.mxu0 0.0
    %877 = vmatpush1.msra.mxu0 0.0
    %878 = vmatprep.subr.mxu0 0.0
    %879 = vmatpush1.msra.mxu0 0.0
    %880 = vmatprep.mubr.f32.mxu0 0.0
    %881 = vmatmul.mubr.f32.gmra.mrb[0].mxu0 %v231
    %v882 = vpop.f32.mrb[0].mxu0
    %v883 = vadd.f32 0.0, %v882
    %v884 = vpop.f32.mrb[0].mxu0
    %885 = vmatprep.mubr.f32.mxu0 0.0
    %886 = vmatmul.mubr.f32.gmra.mrb[0].mxu0 %v234
    %v887 = vpop.f32.mrb[0].mxu0
    %v888 = vadd.f32 0.0, %v887
    %v889 = vpop.f32.mrb[0].mxu0
    %890 = vmatprep.mubr.f32.mxu0 0.0
    %891 = vmatmul.mubr.f32.gmra.mrb[0].mxu0 %v237
    %v892 = vpop.f32.mrb[0].mxu0
    %v893 = vadd.f32 0.0, %v892
    %v894 = vpop.f32.mrb[0].mxu0
    %895 = vmatprep.mubr.f32.mxu0 0.0
    %896 = vmatmul.mubr.f32.gmra.mrb[0].mxu0 %v240
    %v897 = vpop.f32.mrb[0].mxu0
    %v898 = vadd.f32 0.0, %v897
    %v899 = vpop.f32.mrb[0].mxu0
    %900 = vdwg.mxu0
    %v901 = vmul.f32 %v186, %v883
    %v902 = vmul.f32 %v191, %v888
    %v903 = vmul.f32 %v196, %v893
    %v904 = vmul.f32 %v201, %v898
    %v905 = vadd.f32 %v901, %v902
    %v906 = vadd.f32 %v905, %v903
    %v907 = vadd.f32 %v906, %v904
    %v908 = vrot.slane %v907, 4
    %v909 = vadd.f32 %v907, %v908
    %v910 = vrot.slane %v909, 2
    %v911 = vadd.f32 %v909, %v910
    %v912 = vrot.slane %v911, 1
    %v913 = vadd.f32 %v911, %v912
    %v914 = vsub.f32 0.0, %v913
    %v915 = vmin.f32 %v914, 0.0
    %v916 = vand.u32 2147483647, %v914
    %v917 = vsub.f32 0.0, %v916
    %v918 = vmul.f32 %v917, 1.442695
    %v919 = vpow.pop %v918
    %v920 = vadd.f32 %v919, 1.0
    %v921 = vlog2.pop %v920
    %v922 = vmul.f32 %v921, 0.6931472
    %v923 = vmul.f32 -0.5, %v919
    %v924 = vadd.f32 %v923, 1.0
    %v925 = vmul.f32 %v924, %v919
    %v926 = vand.u32 2147483647, %v919
    %vm927 = vcmp.lt.f32.partialorder %v926, 0.0004427343
    %v928 = vsel %vm927, %v925, %v922
    %v929 = vsub.f32 %v915, %v928
    %v930 = vadd.f32 %v787, %v929
    %931 = vst [vmem:[#allocation8] sm:$0x1] %v930
    // Predicated region
    $region34: #{tpu_custom_call.1} parent=1 // pred_check
      _
    $region35: #{tpu_custom_call.1} parent=1 // pred_check_branch
      %933 = sbr.rel (0) target = $region37
    $region36: #{tpu_custom_call.1} parent=1 // pred_region
      %s935 = ssub.s32 16, 16
      %936 = vsyncadd [#allocation4], %s935
      %s938 = sshll.u32 [#allocation8], 4
      %s939 = int_to_ptr.vmem [resolvable:$true] %s938
      %941 = dma.vmem_to_hbm [thread:$0]  %s939, 16, %s5, [#allocation4]
    $region37: #{tpu_custom_call.1} parent=1 // pred_fallthru
      _
    // Predicated region
    $region38: #{tpu_custom_call.1} parent=1 // pred_check
      _
    $region39: #{tpu_custom_call.1} parent=1 // pred_check_branch
      %943 = sbr.rel (0) target = $region41
    $region40: #{tpu_custom_call.1} parent=1 // pred_region
      %944 = dma.done [#allocation4], 16
    $region41: #{tpu_custom_call.1} parent=1 // pred_fallthru
      _
    %945 = vsyncpa [#allocation3], 1
    %946 = vsyncpa [#allocation6], 1
    %947 = vsyncpa [#allocation4], 1

</llo_original>
